<compile_context>
chip_gen: v5e
topology: v5e:2x2
jax: 0.10.0
libtpu: 0.0.40
codegen_flags: <defaults>
</compile_context>

<pallas_src>
import jax
import jax.numpy as jnp
from jax import lax
from jax.experimental import pallas as pl
from jax.experimental.pallas import tpu as pltpu


def decoder_kernel(ids_ref, hid_ref, enc_ref, embed_ref,
                   w1t_ref, w2t_ref, battn_ref, v_ref,
                   wih_ref, bih_ref, whh_ref, bhh_ref,
                   wout_ref, bout_ref,
                   out_ref, hnew_ref, attnw_ref):
    B, T, H = enc_ref.shape
    O, E = embed_ref.shape

    hidden = hid_ref[...]                                    # (B, H)
    enc = enc_ref[...]                                       # (B, T, H)

    # ---------------- embedding (fused gather via one-hot matmul) ----------------
    onehot = (ids_ref[...] ==
              lax.broadcasted_iota(jnp.int32, (B, O), 1)).astype(jnp.float32)     # (B, O)
    emb = jnp.dot(onehot, embed_ref[...], preferred_element_type=jnp.float32)     # (B, E)

    # ---------------- attention scores ----------------
    # energy[b,t,:] = relu(W1 @ h_b + W2 @ enc_{b,t} + b_attn); score[b,t] = v . energy[b,t,:]
    hid_part = (jnp.dot(hidden, w1t_ref[...], preferred_element_type=jnp.float32)
                + battn_ref[...])                            # (B, H)
    w2t_b = jnp.broadcast_to(w2t_ref[...][None], (B, H, H))  # tiny, enables batched MXU matmul
    enc_proj = jnp.einsum('bth,bhk->btk', enc, w2t_b,
                          preferred_element_type=jnp.float32)                      # (B, T, H)
    energy = jnp.maximum(enc_proj + hid_part[:, None, :], 0.0)                     # (B, T, H)
    # VPU multiply + lane reduce instead of B tiny (1,H)x(T,H) MXU dispatches.
    scores = jnp.sum(energy * v_ref[...][None], axis=-1)                           # (B, T)

    # softmax over T (lane reduce), max-stabilized
    m = jnp.max(scores, axis=1, keepdims=True)
    e = jnp.exp(scores - m)
    attn_w = e / jnp.sum(e, axis=1, keepdims=True)           # (B, T)
    attnw_ref[...] = attn_w

    # ---------------- context = attn_w @ enc (VPU mul + XLU reduce over T) --------
    context = jnp.sum(attn_w[:, :, None] * enc, axis=1)      # (B, H)

    # ---------------- GRU cell (single layer, single step), fused input weight ----
    x = jnp.concatenate([emb, context], axis=1)              # (B, E+H)
    gi = jnp.dot(x, wih_ref[...], preferred_element_type=jnp.float32) + bih_ref[...]   # (B, 3H)
    gh = jnp.dot(hidden, whh_ref[...], preferred_element_type=jnp.float32) + bhh_ref[...]
    r = jax.nn.sigmoid(gi[:, 0:H] + gh[:, 0:H])
    z = jax.nn.sigmoid(gi[:, H:2 * H] + gh[:, H:2 * H])
    n = jnp.tanh(gi[:, 2 * H:3 * H] + r * gh[:, 2 * H:3 * H])
    h_new = (1.0 - z) * n + z * hidden                       # (B, H)
    hnew_ref[...] = h_new

    # ---------------- output projection, fused weight over [h_new | context] ------
    hc = jnp.concatenate([h_new, context], axis=1)           # (B, 2H)
    out_ref[...] = (jnp.dot(hc, wout_ref[...], preferred_element_type=jnp.float32)
                    + bout_ref[...])                         # (B, O)


def _pallas_decoder_core(ids2d, hidden_last, enc_bth, kp):
    B, T, H = enc_bth.shape
    O = kp["embed"].shape[0]
    inputs = (ids2d, hidden_last, enc_bth, kp["embed"],
              kp["w1t"], kp["w2t"], kp["battn"], kp["v"],
              kp["wih"], kp["bih"], kp["whh"], kp["bhh"],
              kp["wout"], kp["bout"])
    return pl.pallas_call(
        decoder_kernel,
        out_shape=(jax.ShapeDtypeStruct((B, O), jnp.float32),
                   jax.ShapeDtypeStruct((B, H), jnp.float32),
                   jax.ShapeDtypeStruct((B, T), jnp.float32)),
        in_specs=[pl.BlockSpec(memory_space=pltpu.MemorySpace.VMEM)] * len(inputs),
        out_specs=(pl.BlockSpec(memory_space=pltpu.MemorySpace.VMEM),) * 3,
    )(*inputs)


def init_params(key, embed_size, hidden_size, output_size):
    E, H, O = embed_size, hidden_size, output_size
    ks = jax.random.split(key, 10)
    scale = 0.1
    return {
        "embed": jax.random.normal(ks[0], (O, E), jnp.float32) * scale,
        "W_attn": jax.random.normal(ks[1], (H, 2 * H), jnp.float32) * scale,
        "b_attn": jax.random.normal(ks[2], (H,), jnp.float32) * scale,
        "v": jax.random.normal(ks[3], (H,), jnp.float32) * scale,
        "W_ih": jax.random.normal(ks[4], (3 * H, E + H), jnp.float32) * scale,
        "b_ih": jax.random.normal(ks[5], (3 * H,), jnp.float32) * scale,
        "W_hh": jax.random.normal(ks[6], (3 * H, H), jnp.float32) * scale,
        "b_hh": jax.random.normal(ks[7], (3 * H,), jnp.float32) * scale,
        "W_out": jax.random.normal(ks[8], (O, 2 * H), jnp.float32) * scale,
        "b_out": jax.random.normal(ks[9], (O,), jnp.float32) * scale,
    }


def prepare_kernel_params(p, embed_size, hidden_size):
    """Kernel-layout weights. Call ONCE (hoisted out of the per-step forward)."""
    E, H = embed_size, hidden_size
    return {
        "embed": p["embed"],                                  # (O, E) embedding table
        # attention: W_attn acts on cat([hidden, encoder]) -> split by input block, transpose.
        "w1t": jnp.asarray(p["W_attn"][:, :H].T),             # (H, H)
        "w2t": jnp.asarray(p["W_attn"][:, H:].T),             # (H, H)
        "battn": p["b_attn"][None, :],                        # (1, H)
        "v": p["v"][None, :],                                 # (1, H)
        # GRU: input is cat([embedded, context]) -> single fused transposed weight.
        "wih": jnp.asarray(p["W_ih"].T),                      # (E+H, 3H)
        "bih": p["b_ih"][None, :],                            # (1, 3H)
        "whh": jnp.asarray(p["W_hh"].T),                      # (H, 3H)
        "bhh": p["b_hh"][None, :],                            # (1, 3H)
        # output: acts on cat([h_new, context]) -> single fused transposed weight.
        "wout": jnp.asarray(p["W_out"].T),                    # (2H, O)
        "bout": p["b_out"][None, :],                          # (1, O)
    }


@jax.jit
def decoder_forward(kp, input_ids, last_hidden, encoder_outputs):
    """input_ids: (B,) int32, last_hidden: (1, B, H), encoder_outputs: (T, B, H)."""
    ids2d = input_ids.astype(jnp.int32)[:, None]              # (B, 1)
    hidden_last = last_hidden[-1]                             # (B, H)
    # (B, T, H) layout lets the attention energy run as one B-batched MXU einsum inside
    # the kernel (B=2 dispatches of M=T) instead of T tiny M=B matmuls.
    enc_bth = jnp.transpose(encoder_outputs, (1, 0, 2))       # (B, T, H)
    output, h_new, attn_w = _pallas_decoder_core(ids2d, hidden_last, enc_bth, kp)
    return output, h_new[None], attn_w[:, None, :]            # (B,O), (1,B,H), (B,1,T)


def decoder_forward_ref(params, input_ids, last_hidden, encoder_outputs,
                        *, embed_size, hidden_size):
    """Pure-JAX reference mirroring the PyTorch forward (eval mode)."""
    H = hidden_size
    emb = jnp.take(params["embed"], input_ids, axis=0)        # (B, E)
    hidden = last_hidden[-1]                                  # (B, H)
    enc = jnp.transpose(encoder_outputs, (1, 0, 2))           # (B, T, H)
    B, T, _ = enc.shape
    h_rep = jnp.broadcast_to(hidden[:, None, :], (B, T, H))
    cat = jnp.concatenate([h_rep, enc], axis=2)               # (B, T, 2H)
    energy = jax.nn.relu(jnp.einsum("btk,hk->bth", cat, params["W_attn"]) + params["b_attn"])
    scores = jnp.einsum("bth,h->bt", energy, params["v"])     # (B, T)
    attn_w = jax.nn.softmax(scores, axis=1)                   # (B, T)
    context = jnp.einsum("bt,bth->bh", attn_w, enc)           # (B, H)
    x = jnp.concatenate([emb, context], axis=1)               # (B, E+H)
    gi = x @ params["W_ih"].T + params["b_ih"]
    gh = hidden @ params["W_hh"].T + params["b_hh"]
    r = jax.nn.sigmoid(gi[:, :H] + gh[:, :H])
    z = jax.nn.sigmoid(gi[:, H:2 * H] + gh[:, H:2 * H])
    n = jnp.tanh(gi[:, 2 * H:] + r * gh[:, 2 * H:])
    h_new = (1.0 - z) * n + z * hidden
    out = jnp.concatenate([h_new, context], axis=1) @ params["W_out"].T + params["b_out"]
    return out, h_new[None], attn_w[:, None, :]


if __name__ == "__main__":
    B, T = 2, 8
    embed_size, hidden_size, output_size = 32, 32, 16

    key = jax.random.PRNGKey(0)
    kpk, k1, k2, k3 = jax.random.split(key, 4)
    params = init_params(kpk, embed_size, hidden_size, output_size)
    kernel_params = prepare_kernel_params(params, embed_size, hidden_size)  # hoisted: once

    input_ids = jax.random.randint(k1, (B,), 0, output_size, dtype=jnp.int32)
    last_hidden = jax.random.normal(k2, (1, B, hidden_size), jnp.float32)
    encoder_outputs = jax.random.normal(k3, (T, B, hidden_size), jnp.float32)

    out, hid, attn = decoder_forward(kernel_params, input_ids, last_hidden, encoder_outputs)
    jax.block_until_ready((out, hid, attn))

    out_r, hid_r, attn_r = decoder_forward_ref(params, input_ids, last_hidden, encoder_outputs,
                                               embed_size=embed_size, hidden_size=hidden_size)
    assert out.shape == (B, output_size) and hid.shape == (1, B, hidden_size) \
        and attn.shape == (B, 1, T)
    assert jnp.allclose(out, out_r, atol=1e-4), "output mismatch"
    assert jnp.allclose(hid, hid_r, atol=1e-4), "hidden mismatch"
    assert jnp.allclose(attn, attn_r, atol=1e-4), "attention mismatch"

    print("KERNEL_OK")
</pallas_src>

<mosaic_0001>
module attributes {stable_mosaic.version = 11 : i64} {
  func.func @decoder_kernel(%arg0: memref<2x1xi32, #tpu.memory_space<vmem>>, %arg1: memref<2x32xf32, #tpu.memory_space<vmem>>, %arg2: memref<2x8x32xf32, #tpu.memory_space<vmem>>, %arg3: memref<16x32xf32, #tpu.memory_space<vmem>>, %arg4: memref<32x32xf32, #tpu.memory_space<vmem>>, %arg5: memref<32x32xf32, #tpu.memory_space<vmem>>, %arg6: memref<1x32xf32, #tpu.memory_space<vmem>>, %arg7: memref<1x32xf32, #tpu.memory_space<vmem>>, %arg8: memref<64x96xf32, #tpu.memory_space<vmem>>, %arg9: memref<1x96xf32, #tpu.memory_space<vmem>>, %arg10: memref<32x96xf32, #tpu.memory_space<vmem>>, %arg11: memref<1x96xf32, #tpu.memory_space<vmem>>, %arg12: memref<64x16xf32, #tpu.memory_space<vmem>>, %arg13: memref<1x16xf32, #tpu.memory_space<vmem>>, %arg14: memref<2x16xf32, #tpu.memory_space<vmem>>, %arg15: memref<2x32xf32, #tpu.memory_space<vmem>>, %arg16: memref<2x8xf32, #tpu.memory_space<vmem>>) attributes {dimension_semantics = [], scalar_prefetch = 0 : i64, scratch_operands = 0 : i64, tpu.core_type = #tpu.core_type<tc>} {
    %c0 = arith.constant 0 : index
    %c0_0 = arith.constant 0 : index
    %0 = vector.load %arg1[%c0, %c0_0] : memref<2x32xf32, #tpu.memory_space<vmem>>, vector<2x32xf32>
    %c0_1 = arith.constant 0 : index
    %c0_2 = arith.constant 0 : index
    %c0_3 = arith.constant 0 : index
    %1 = vector.load %arg2[%c0_1, %c0_2, %c0_3] : memref<2x8x32xf32, #tpu.memory_space<vmem>>, vector<2x8x32xf32>
    %c0_4 = arith.constant 0 : index
    %c0_5 = arith.constant 0 : index
    %2 = vector.load %arg0[%c0_4, %c0_5] : memref<2x1xi32, #tpu.memory_space<vmem>>, vector<2x1xi32>
    %3 = tpu.iota {dimensions = array<i32: 1>} : vector<2x16xi32>
    %4 = vector.broadcast %2 : vector<2x1xi32> to vector<2x16xi32>
    %5 = arith.cmpi eq, %4, %3 : vector<2x16xi32>
    %6 = arith.extui %5 : vector<2x16xi1> to vector<2x16xi32>
    %7 = arith.sitofp %6 : vector<2x16xi32> to vector<2x16xf32>
    %c0_6 = arith.constant 0 : index
    %c0_7 = arith.constant 0 : index
    %8 = vector.load %arg3[%c0_6, %c0_7] : memref<16x32xf32, #tpu.memory_space<vmem>>, vector<16x32xf32>
    %cst = arith.constant dense<0.000000e+00> : vector<2x32xf32>
    %9 = tpu.matmul %7, %8, %cst {dimension_numbers = #tpu.dot_dimension_numbers<[1], [0], [0], [1], [0, 0, 1, 1], [], []>} : vector<2x16xf32>, vector<16x32xf32>, vector<2x32xf32> -> vector<2x32xf32>
    %c0_8 = arith.constant 0 : index
    %c0_9 = arith.constant 0 : index
    %10 = vector.load %arg4[%c0_8, %c0_9] : memref<32x32xf32, #tpu.memory_space<vmem>>, vector<32x32xf32>
    %cst_10 = arith.constant dense<0.000000e+00> : vector<2x32xf32>
    %11 = tpu.matmul %0, %10, %cst_10 {dimension_numbers = #tpu.dot_dimension_numbers<[1], [0], [0], [1], [0, 0, 1, 1], [], []>} : vector<2x32xf32>, vector<32x32xf32>, vector<2x32xf32> -> vector<2x32xf32>
    %c0_11 = arith.constant 0 : index
    %c0_12 = arith.constant 0 : index
    %12 = vector.load %arg6[%c0_11, %c0_12] : memref<1x32xf32, #tpu.memory_space<vmem>>, vector<1x32xf32>
    %13 = vector.broadcast %12 : vector<1x32xf32> to vector<2x32xf32>
    %14 = arith.addf %11, %13 : vector<2x32xf32>
    %c0_13 = arith.constant 0 : index
    %c0_14 = arith.constant 0 : index
    %15 = vector.load %arg5[%c0_13, %c0_14] : memref<32x32xf32, #tpu.memory_space<vmem>>, vector<32x32xf32>
    %16 = vector.shape_cast %15 : vector<32x32xf32> to vector<1x32x32xf32>
    %17 = vector.shape_cast %16 : vector<1x32x32xf32> to vector<1x32x32xf32>
    %18 = vector.broadcast %17 : vector<1x32x32xf32> to vector<2x32x32xf32>
    "tpu.trace_start"() <{level = 10 : i32, message = "bth,bhk->btk"}> : () -> ()
    %cst_15 = arith.constant dense<0.000000e+00> : vector<2x8x32xf32>
    %19 = tpu.matmul %1, %18, %cst_15 {dimension_numbers = #tpu.dot_dimension_numbers<[2], [1], [1], [2], [0, 0, 0, 1, 1, 2], [0], [0]>} : vector<2x8x32xf32>, vector<2x32x32xf32>, vector<2x8x32xf32> -> vector<2x8x32xf32>
    "tpu.trace_stop"() : () -> ()
    %20 = vector.shape_cast %14 : vector<2x32xf32> to vector<2x1x32xf32>
    %21 = vector.broadcast %20 : vector<2x1x32xf32> to vector<2x8x32xf32>
    %22 = arith.addf %19, %21 : vector<2x8x32xf32>
    %cst_16 = arith.constant 0.000000e+00 : f32
    %23 = vector.broadcast %cst_16 : f32 to vector<2x8x32xf32>
    %24 = arith.maximumf %22, %23 : vector<2x8x32xf32>
    %c0_17 = arith.constant 0 : index
    %c0_18 = arith.constant 0 : index
    %25 = vector.load %arg7[%c0_17, %c0_18] : memref<1x32xf32, #tpu.memory_space<vmem>>, vector<1x32xf32>
    %26 = vector.shape_cast %25 : vector<1x32xf32> to vector<1x1x32xf32>
    %27 = vector.broadcast %26 : vector<1x1x32xf32> to vector<2x8x32xf32>
    %28 = arith.mulf %24, %27 : vector<2x8x32xf32>
    %cst_19 = arith.constant dense<0.000000e+00> : vector<2x8xf32>
    %29 = vector.multi_reduction <add>, %28, %cst_19 [2] : vector<2x8x32xf32> to vector<2x8xf32>
    %cst_20 = arith.constant dense<0xFF800000> : vector<2xf32>
    %30 = vector.multi_reduction <maximumf>, %29, %cst_20 [1] : vector<2x8xf32> to vector<2xf32>
    %31 = vector.shape_cast %30 : vector<2xf32> to vector<2x1xf32>
    %32 = vector.broadcast %31 : vector<2x1xf32> to vector<2x8xf32>
    %33 = arith.subf %29, %32 : vector<2x8xf32>
    %34 = math.exp %33 : vector<2x8xf32>
    %cst_21 = arith.constant dense<0.000000e+00> : vector<2xf32>
    %35 = vector.multi_reduction <add>, %34, %cst_21 [1] : vector<2x8xf32> to vector<2xf32>
    %36 = vector.shape_cast %35 : vector<2xf32> to vector<2x1xf32>
    %37 = vector.broadcast %36 : vector<2x1xf32> to vector<2x8xf32>
    %38 = arith.divf %34, %37 : vector<2x8xf32>
    %c0_22 = arith.constant 0 : index
    %c0_23 = arith.constant 0 : index
    %39 = vector.load %arg16[%c0_22, %c0_23] : memref<2x8xf32, #tpu.memory_space<vmem>>, vector<2x8xf32>
    tpu.vector_store %arg16[%c0_22, %c0_23], %38 {strides = array<i32>} : memref<2x8xf32, #tpu.memory_space<vmem>>, vector<2x8xf32>,
    %40 = vector.shape_cast %38 : vector<2x8xf32> to vector<2x8x1xf32>
    %41 = vector.broadcast %40 : vector<2x8x1xf32> to vector<2x8x32xf32>
    %42 = arith.mulf %41, %1 : vector<2x8x32xf32>
    %cst_24 = arith.constant dense<0.000000e+00> : vector<2x32xf32>
    %43 = vector.multi_reduction <add>, %42, %cst_24 [1] : vector<2x8x32xf32> to vector<2x32xf32>
    %44 = tpu.concatenate %9, %43 in 1 : vector<2x32xf32>, vector<2x32xf32> -> vector<2x64xf32>
    %c0_25 = arith.constant 0 : index
    %c0_26 = arith.constant 0 : index
    %45 = vector.load %arg8[%c0_25, %c0_26] : memref<64x96xf32, #tpu.memory_space<vmem>>, vector<64x96xf32>
    %cst_27 = arith.constant dense<0.000000e+00> : vector<2x96xf32>
    %46 = tpu.matmul %44, %45, %cst_27 {dimension_numbers = #tpu.dot_dimension_numbers<[1], [0], [0], [1], [0, 0, 1, 1], [], []>} : vector<2x64xf32>, vector<64x96xf32>, vector<2x96xf32> -> vector<2x96xf32>
    %c0_28 = arith.constant 0 : index
    %c0_29 = arith.constant 0 : index
    %47 = vector.load %arg9[%c0_28, %c0_29] : memref<1x96xf32, #tpu.memory_space<vmem>>, vector<1x96xf32>
    %48 = vector.broadcast %47 : vector<1x96xf32> to vector<2x96xf32>
    %49 = arith.addf %46, %48 : vector<2x96xf32>
    %c0_30 = arith.constant 0 : index
    %c0_31 = arith.constant 0 : index
    %50 = vector.load %arg10[%c0_30, %c0_31] : memref<32x96xf32, #tpu.memory_space<vmem>>, vector<32x96xf32>
    %cst_32 = arith.constant dense<0.000000e+00> : vector<2x96xf32>
    %51 = tpu.matmul %0, %50, %cst_32 {dimension_numbers = #tpu.dot_dimension_numbers<[1], [0], [0], [1], [0, 0, 1, 1], [], []>} : vector<2x32xf32>, vector<32x96xf32>, vector<2x96xf32> -> vector<2x96xf32>
    %c0_33 = arith.constant 0 : index
    %c0_34 = arith.constant 0 : index
    %52 = vector.load %arg11[%c0_33, %c0_34] : memref<1x96xf32, #tpu.memory_space<vmem>>, vector<1x96xf32>
    %53 = vector.broadcast %52 : vector<1x96xf32> to vector<2x96xf32>
    %54 = arith.addf %51, %53 : vector<2x96xf32>
    %55 = vector.extract_strided_slice %49 {offsets = [0, 0], sizes = [2, 32], strides = [1, 1]} : vector<2x96xf32> to vector<2x32xf32>
    %56 = vector.extract_strided_slice %54 {offsets = [0, 0], sizes = [2, 32], strides = [1, 1]} : vector<2x96xf32> to vector<2x32xf32>
    %57 = arith.addf %55, %56 : vector<2x32xf32>
    %58 = arith.negf %57 : vector<2x32xf32>
    %59 = math.exp %58 : vector<2x32xf32>
    %cst_35 = arith.constant 1.000000e+00 : f32
    %60 = vector.broadcast %cst_35 : f32 to vector<2x32xf32>
    %61 = arith.addf %60, %59 : vector<2x32xf32>
    %62 = arith.divf %60, %61 : vector<2x32xf32>
    %63 = vector.extract_strided_slice %49 {offsets = [0, 32], sizes = [2, 32], strides = [1, 1]} : vector<2x96xf32> to vector<2x32xf32>
    %64 = vector.extract_strided_slice %54 {offsets = [0, 32], sizes = [2, 32], strides = [1, 1]} : vector<2x96xf32> to vector<2x32xf32>
    %65 = arith.addf %63, %64 : vector<2x32xf32>
    %66 = arith.negf %65 : vector<2x32xf32>
    %67 = math.exp %66 : vector<2x32xf32>
    %cst_36 = arith.constant 1.000000e+00 : f32
    %68 = vector.broadcast %cst_36 : f32 to vector<2x32xf32>
    %69 = arith.addf %68, %67 : vector<2x32xf32>
    %70 = arith.divf %68, %69 : vector<2x32xf32>
    %71 = vector.extract_strided_slice %49 {offsets = [0, 64], sizes = [2, 32], strides = [1, 1]} : vector<2x96xf32> to vector<2x32xf32>
    %72 = vector.extract_strided_slice %54 {offsets = [0, 64], sizes = [2, 32], strides = [1, 1]} : vector<2x96xf32> to vector<2x32xf32>
    %73 = arith.mulf %62, %72 : vector<2x32xf32>
    %74 = arith.addf %71, %73 : vector<2x32xf32>
    %75 = math.tanh %74 : vector<2x32xf32>
    %cst_37 = arith.constant 1.000000e+00 : f32
    %76 = vector.broadcast %cst_37 : f32 to vector<2x32xf32>
    %77 = arith.subf %76, %70 : vector<2x32xf32>
    %78 = arith.mulf %77, %75 : vector<2x32xf32>
    %79 = arith.mulf %70, %0 : vector<2x32xf32>
    %80 = arith.addf %78, %79 : vector<2x32xf32>
    %c0_38 = arith.constant 0 : index
    %c0_39 = arith.constant 0 : index
    %81 = vector.load %arg15[%c0_38, %c0_39] : memref<2x32xf32, #tpu.memory_space<vmem>>, vector<2x32xf32>
    tpu.vector_store %arg15[%c0_38, %c0_39], %80 {strides = array<i32>} : memref<2x32xf32, #tpu.memory_space<vmem>>, vector<2x32xf32>,
    %82 = tpu.concatenate %80, %43 in 1 : vector<2x32xf32>, vector<2x32xf32> -> vector<2x64xf32>
    %c0_40 = arith.constant 0 : index
    %c0_41 = arith.constant 0 : index
    %83 = vector.load %arg12[%c0_40, %c0_41] : memref<64x16xf32, #tpu.memory_space<vmem>>, vector<64x16xf32>
    %cst_42 = arith.constant dense<0.000000e+00> : vector<2x16xf32>
    %84 = tpu.matmul %82, %83, %cst_42 {dimension_numbers = #tpu.dot_dimension_numbers<[1], [0], [0], [1], [0, 0, 1, 1], [], []>} : vector<2x64xf32>, vector<64x16xf32>, vector<2x16xf32> -> vector<2x16xf32>
    %c0_43 = arith.constant 0 : index
    %c0_44 = arith.constant 0 : index
    %85 = vector.load %arg13[%c0_43, %c0_44] : memref<1x16xf32, #tpu.memory_space<vmem>>, vector<1x16xf32>
    %86 = vector.broadcast %85 : vector<1x16xf32> to vector<2x16xf32>
    %87 = arith.addf %84, %86 : vector<2x16xf32>
    %c0_45 = arith.constant 0 : index
    %c0_46 = arith.constant 0 : index
    %88 = vector.load %arg14[%c0_45, %c0_46] : memref<2x16xf32, #tpu.memory_space<vmem>>, vector<2x16xf32>
    tpu.vector_store %arg14[%c0_45, %c0_46], %87 {strides = array<i32>} : memref<2x16xf32, #tpu.memory_space<vmem>>, vector<2x16xf32>,
    return
  }
}

</mosaic_0001>

<llo_original>
// kernel: decoder_forward.1
$region0: #{decoder_forward.1}
  #allocation0 [shape = 'u32[]', space=smem, size = 0x4, offset = 0x4, fixed_abs, tag = 'smem constant byte address 0x4 - core index']
  #allocation1 [shape = 'u32[72,128]{1,0:T(1,128)}', space=vmem, size = 0x9000, scoped, tag = 'internal scratch']
  %s0 = inlined_call_operand.vmem [shape: s32[2,1], index: 0, kind: input, shape index: {}]
  %s1 = inlined_call_operand.hbm [shape: f32[2,32], index: 1, kind: input, shape index: {}]
  %s2 = inlined_call_operand.vmem [shape: f32[2,8,32], index: 2, kind: input, shape index: {}]
  %s3 = inlined_call_operand.hbm [shape: f32[16,32], index: 3, kind: input, shape index: {}]
  %s4 = inlined_call_operand.vmem [shape: f32[32,32], index: 4, kind: input, shape index: {}]
  %s5 = inlined_call_operand.hbm [shape: f32[32,32], index: 5, kind: input, shape index: {}]
  %s6 = inlined_call_operand.vmem [shape: f32[1,32], index: 6, kind: input, shape index: {}]
  %s7 = inlined_call_operand.hbm [shape: f32[1,32], index: 7, kind: input, shape index: {}]
  %s8 = inlined_call_operand.vmem [shape: f32[64,96], index: 8, kind: input, shape index: {}]
  %s9 = inlined_call_operand.hbm [shape: f32[1,96], index: 9, kind: input, shape index: {}]
  %s10 = inlined_call_operand.hbm [shape: f32[32,96], index: 10, kind: input, shape index: {}]
  %s11 = inlined_call_operand.hbm [shape: f32[1,96], index: 11, kind: input, shape index: {}]
  %s12 = inlined_call_operand.vmem [shape: f32[64,16], index: 12, kind: input, shape index: {}]
  %s13 = inlined_call_operand.hbm [shape: f32[1,16], index: 13, kind: input, shape index: {}]
  %s14 = inlined_call_operand.hbm [shape: f32[2,16], index: 14, kind: output, shape index: {0}]
  %s15 = inlined_call_operand.hbm [shape: f32[2,32], index: 15, kind: output, shape index: {1}]
  %s16 = inlined_call_operand.hbm [shape: f32[2,8], index: 16, kind: output, shape index: {2}]
  %17 = xla_tuple %s14, %s15, %s16
  %s18 = sld [smem:[#allocation0]]
  $region114: #{decoder_forward.1} parent=0
    _
  %s20 = ssub.s32 1, %s18
  %s21 = scalar_select 0, %s20, %s18
  $region1: #{decoder_forward.1} parent=0
    #allocation2 [shape = 'u8[1024]{0}', space=vmem, size = 0x400, scoped, tag = 'input window, operand 1, single buffered']
    #allocation3 [shape = 's32[1]{0}', space=sflag, size = 0x4, scoped, tag = 'scoped memory for decoder_forward.1']
    #allocation4 [shape = 's32[1]{0}', space=sflag, size = 0x4, scoped, tag = 'scoped memory for decoder_forward.1']
    #allocation5 [shape = 'u8[8192]{0}', space=vmem, size = 0x2000, scoped, tag = 'input window, operand 3, single buffered']
    #allocation6 [shape = 's32[1]{0}', space=sflag, size = 0x4, scoped, tag = 'scoped memory for decoder_forward.1']
    #allocation7 [shape = 'u8[16384]{0}', space=vmem, size = 0x4000, scoped, tag = 'input window, operand 5, single buffered']
    #allocation8 [shape = 'u8[512]{0}', space=vmem, size = 0x400, scoped, tag = 'input window, operand 7, single buffered']
    #allocation9 [shape = 's32[1]{0}', space=sflag, size = 0x4, scoped, tag = 'scoped memory for decoder_forward.1']
    #allocation10 [shape = 'u8[512]{0}', space=vmem, size = 0x400, scoped, tag = 'input window, operand 9, single buffered']
    #allocation11 [shape = 'u8[16384]{0}', space=vmem, size = 0x4000, scoped, tag = 'input window, operand 10, single buffered']
    #allocation12 [shape = 's32[1]{0}', space=sflag, size = 0x4, scoped, tag = 'scoped memory for decoder_forward.1']
    #allocation13 [shape = 'u8[512]{0}', space=vmem, size = 0x400, scoped, tag = 'input window, operand 11, single buffered']
    #allocation14 [shape = 'u8[512]{0}', space=vmem, size = 0x400, scoped, tag = 'input window, operand 13, single buffered']
    #allocation15 [shape = 's32[1]{0}', space=sflag, size = 0x4, scoped, tag = 'scoped memory for decoder_forward.1']
    #allocation16 [shape = 'u8[1024]{0}', space=vmem, size = 0x400, scoped, tag = 'output window, operand 0, single buffered']
    #allocation17 [shape = 'u8[1024]{0}', space=vmem, size = 0x400, scoped, tag = 'output window, operand 1, single buffered']
    #allocation18 [shape = 's32[1]{0}', space=sflag, size = 0x4, scoped, tag = 'scoped memory for decoder_forward.1']
    #allocation19 [shape = 'u8[1024]{0}', space=vmem, size = 0x400, scoped, tag = 'output window, operand 2, single buffered']
    %22 = vsyncpa [#allocation3], 0
    %23 = vsyncpa [#allocation6], 0
    %24 = vsyncpa [#allocation9], 0
    %25 = vsyncpa [#allocation12], 0
    %26 = vsyncpa [#allocation15], 0
    %27 = vsyncpa [#allocation4], 0
    %28 = vsyncpa [#allocation18], 0
    // Predicated region
    $region2: #{decoder_forward.1} parent=1 // pred_check
      _
    $region3: #{decoder_forward.1} parent=1 // pred_check_branch
      %30 = sbr.rel (0) target = $region5
    $region4: #{decoder_forward.1} parent=1 // pred_region
      _
    $region5: #{decoder_forward.1} parent=1 // pred_fallthru
      _
    // Predicated region
    $region6: #{decoder_forward.1} parent=1 // pred_check
      _
    $region7: #{decoder_forward.1} parent=1 // pred_check_branch
      %32 = sbr.rel (0) target = $region9
    $region8: #{decoder_forward.1} parent=1 // pred_region
      %34 = vsyncadd [#allocation3], 0
      %s36 = sshll.u32 %s1, 4
      %s37 = int_to_ptr.hbm [resolvable:$true] %s36
      %s38 = sshll.u32 [#allocation2], 4
      %s39 = int_to_ptr.vmem [resolvable:$true] %s38
      %41 = dma.hbm_to_vmem [thread:$0]  %s37, 32, %s39, [#allocation3]
    $region9: #{decoder_forward.1} parent=1 // pred_fallthru
      _
    // Predicated region
    $region10: #{decoder_forward.1} parent=1 // pred_check
      _
    $region11: #{decoder_forward.1} parent=1 // pred_check_branch
      %43 = sbr.rel (0) target = $region13
    $region12: #{decoder_forward.1} parent=1 // pred_region
      _
    $region13: #{decoder_forward.1} parent=1 // pred_fallthru
      _
    // Predicated region
    $region14: #{decoder_forward.1} parent=1 // pred_check
      _
    $region15: #{decoder_forward.1} parent=1 // pred_check_branch
      %45 = sbr.rel (0) target = $region17
    $region16: #{decoder_forward.1} parent=1 // pred_region
      %47 = vsyncadd [#allocation6], 0
      %s48 = sshll.u32 %s3, 4
      %s49 = int_to_ptr.hbm [resolvable:$true] %s48
      %s50 = sshll.u32 [#allocation5], 4
      %s51 = int_to_ptr.vmem [resolvable:$true] %s50
      %56 = dma.hbm_to_vmem [thread:$0]  %s49, 256, %s51, [#allocation6], 128, 128, 8
    $region17: #{decoder_forward.1} parent=1 // pred_fallthru
      _
    // Predicated region
    $region18: #{decoder_forward.1} parent=1 // pred_check
      _
    $region19: #{decoder_forward.1} parent=1 // pred_check_branch
      %58 = sbr.rel (0) target = $region21
    $region20: #{decoder_forward.1} parent=1 // pred_region
      _
    $region21: #{decoder_forward.1} parent=1 // pred_fallthru
      _
    // Predicated region
    $region22: #{decoder_forward.1} parent=1 // pred_check
      _
    $region23: #{decoder_forward.1} parent=1 // pred_check_branch
      %60 = sbr.rel (0) target = $region25
    $region24: #{decoder_forward.1} parent=1 // pred_region
      %62 = vsyncadd [#allocation6], 0
      %s63 = sshll.u32 %s5, 4
      %s64 = int_to_ptr.hbm [resolvable:$true] %s63
      %s65 = sshll.u32 [#allocation7], 4
      %s66 = int_to_ptr.vmem [resolvable:$true] %s65
      %71 = dma.hbm_to_vmem [thread:$0]  %s64, 512, %s66, [#allocation6], 128, 128, 8
    $region25: #{decoder_forward.1} parent=1 // pred_fallthru
      _
    // Predicated region
    $region26: #{decoder_forward.1} parent=1 // pred_check
      _
    $region27: #{decoder_forward.1} parent=1 // pred_check_branch
      %73 = sbr.rel (0) target = $region29
    $region28: #{decoder_forward.1} parent=1 // pred_region
      _
    $region29: #{decoder_forward.1} parent=1 // pred_fallthru
      _
    // Predicated region
    $region30: #{decoder_forward.1} parent=1 // pred_check
      _
    $region31: #{decoder_forward.1} parent=1 // pred_check_branch
      %75 = sbr.rel (0) target = $region33
    $region32: #{decoder_forward.1} parent=1 // pred_region
      %77 = vsyncadd [#allocation9], 0
      %s79 = sshll.u32 %s7, 4
      %s80 = int_to_ptr.hbm [resolvable:$true] %s79
      %s81 = sshll.u32 [#allocation8], 4
      %s82 = int_to_ptr.vmem [resolvable:$true] %s81
      %84 = dma.hbm_to_vmem [thread:$0]  %s80, 16, %s82, [#allocation9]
    $region33: #{decoder_forward.1} parent=1 // pred_fallthru
      _
    // Predicated region
    $region34: #{decoder_forward.1} parent=1 // pred_check
      _
    $region35: #{decoder_forward.1} parent=1 // pred_check_branch
      %86 = sbr.rel (0) target = $region37
    $region36: #{decoder_forward.1} parent=1 // pred_region
      _
    $region37: #{decoder_forward.1} parent=1 // pred_fallthru
      _
    // Predicated region
    $region38: #{decoder_forward.1} parent=1 // pred_check
      _
    $region39: #{decoder_forward.1} parent=1 // pred_check_branch
      %88 = sbr.rel (0) target = $region41
    $region40: #{decoder_forward.1} parent=1 // pred_region
      %90 = vsyncadd [#allocation9], 0
      %s92 = sshll.u32 %s9, 4
      %s93 = int_to_ptr.hbm [resolvable:$true] %s92
      %s94 = sshll.u32 [#allocation10], 4
      %s95 = int_to_ptr.vmem [resolvable:$true] %s94
      %97 = dma.hbm_to_vmem [thread:$0]  %s93, 16, %s95, [#allocation9]
    $region41: #{decoder_forward.1} parent=1 // pred_fallthru
      _
    // Predicated region
    $region42: #{decoder_forward.1} parent=1 // pred_check
      _
    $region43: #{decoder_forward.1} parent=1 // pred_check_branch
      %99 = sbr.rel (0) target = $region45
    $region44: #{decoder_forward.1} parent=1 // pred_region
      %101 = vsyncadd [#allocation12], 0
      %s102 = sshll.u32 %s10, 4
      %s103 = int_to_ptr.hbm [resolvable:$true] %s102
      %s104 = sshll.u32 [#allocation11], 4
      %s105 = int_to_ptr.vmem [resolvable:$true] %s104
      %110 = dma.hbm_to_vmem [thread:$0]  %s103, 512, %s105, [#allocation12], 128, 128, 8
    $region45: #{decoder_forward.1} parent=1 // pred_fallthru
      _
    // Predicated region
    $region46: #{decoder_forward.1} parent=1 // pred_check
      _
    $region47: #{decoder_forward.1} parent=1 // pred_check_branch
      %112 = sbr.rel (0) target = $region49
    $region48: #{decoder_forward.1} parent=1 // pred_region
      %114 = vsyncadd [#allocation12], 0
      %s116 = sshll.u32 %s11, 4
      %s117 = int_to_ptr.hbm [resolvable:$true] %s116
      %s118 = sshll.u32 [#allocation13], 4
      %s119 = int_to_ptr.vmem [resolvable:$true] %s118
      %121 = dma.hbm_to_vmem [thread:$0]  %s117, 16, %s119, [#allocation12]
    $region49: #{decoder_forward.1} parent=1 // pred_fallthru
      _
    // Predicated region
    $region50: #{decoder_forward.1} parent=1 // pred_check
      _
    $region51: #{decoder_forward.1} parent=1 // pred_check_branch
      %123 = sbr.rel (0) target = $region53
    $region52: #{decoder_forward.1} parent=1 // pred_region
      _
    $region53: #{decoder_forward.1} parent=1 // pred_fallthru
      _
    // Predicated region
    $region54: #{decoder_forward.1} parent=1 // pred_check
      _
    $region55: #{decoder_forward.1} parent=1 // pred_check_branch
      %125 = sbr.rel (0) target = $region57
    $region56: #{decoder_forward.1} parent=1 // pred_region
      %127 = vsyncadd [#allocation15], 0
      %s129 = sshll.u32 %s13, 4
      %s130 = int_to_ptr.hbm [resolvable:$true] %s129
      %s131 = sshll.u32 [#allocation14], 4
      %s132 = int_to_ptr.vmem [resolvable:$true] %s131
      %134 = dma.hbm_to_vmem [thread:$0]  %s130, 16, %s132, [#allocation15]
    $region57: #{decoder_forward.1} parent=1 // pred_fallthru
      _
    // Predicated region
    $region58: #{decoder_forward.1} parent=1 // pred_check
      _
    $region59: #{decoder_forward.1} parent=1 // pred_check_branch
      %136 = sbr.rel (0) target = $region61
    $region60: #{decoder_forward.1} parent=1 // pred_region
      %138 = dma.done [#allocation3], 32
    $region61: #{decoder_forward.1} parent=1 // pred_fallthru
      _
    // Predicated region
    $region62: #{decoder_forward.1} parent=1 // pred_check
      _
    $region63: #{decoder_forward.1} parent=1 // pred_check_branch
      %140 = sbr.rel (0) target = $region65
    $region64: #{decoder_forward.1} parent=1 // pred_region
      %142 = dma.done [#allocation6], 256
    $region65: #{decoder_forward.1} parent=1 // pred_fallthru
      _
    // Predicated region
    $region66: #{decoder_forward.1} parent=1 // pred_check
      _
    $region67: #{decoder_forward.1} parent=1 // pred_check_branch
      %144 = sbr.rel (0) target = $region69
    $region68: #{decoder_forward.1} parent=1 // pred_region
      %146 = dma.done [#allocation6], 512
    $region69: #{decoder_forward.1} parent=1 // pred_fallthru
      _
    // Predicated region
    $region70: #{decoder_forward.1} parent=1 // pred_check
      _
    $region71: #{decoder_forward.1} parent=1 // pred_check_branch
      %148 = sbr.rel (0) target = $region73
    $region72: #{decoder_forward.1} parent=1 // pred_region
      %150 = dma.done [#allocation9], 16
    $region73: #{decoder_forward.1} parent=1 // pred_fallthru
      _
    // Predicated region
    $region74: #{decoder_forward.1} parent=1 // pred_check
      _
    $region75: #{decoder_forward.1} parent=1 // pred_check_branch
      %152 = sbr.rel (0) target = $region77
    $region76: #{decoder_forward.1} parent=1 // pred_region
      %154 = dma.done [#allocation9], 16
    $region77: #{decoder_forward.1} parent=1 // pred_fallthru
      _
    // Predicated region
    $region78: #{decoder_forward.1} parent=1 // pred_check
      _
    $region79: #{decoder_forward.1} parent=1 // pred_check_branch
      %156 = sbr.rel (0) target = $region81
    $region80: #{decoder_forward.1} parent=1 // pred_region
      %158 = dma.done [#allocation12], 512
    $region81: #{decoder_forward.1} parent=1 // pred_fallthru
      _
    // Predicated region
    $region82: #{decoder_forward.1} parent=1 // pred_check
      _
    $region83: #{decoder_forward.1} parent=1 // pred_check_branch
      %160 = sbr.rel (0) target = $region85
    $region84: #{decoder_forward.1} parent=1 // pred_region
      %162 = dma.done [#allocation12], 16
    $region85: #{decoder_forward.1} parent=1 // pred_fallthru
      _
    // Predicated region
    $region86: #{decoder_forward.1} parent=1 // pred_check
      _
    $region87: #{decoder_forward.1} parent=1 // pred_check_branch
      %164 = sbr.rel (0) target = $region89
    $region88: #{decoder_forward.1} parent=1 // pred_region
      %166 = dma.done [#allocation15], 16
    $region89: #{decoder_forward.1} parent=1 // pred_fallthru
      _
    %v167 = vld [vmem:[#allocation2] sm:$0x3]
    %v168 = vld [vmem:[%s2] sm:$0xff]
    %v169 = vld [vmem:[%s2 + $0x8] sm:$0xff]
    %v170 = vld [vmem:[%s0] sm:$0x3]
    %v171 = vlaneseq
    %v172 = vand.u32 %v171, 127
    %173 = vset.pattern.permute.xlu0 0
    %174 = vperm.xlu0 %173, %v170
    %v175 = vpop.permute.xlu0 %174
    %vm176 = vcmp.eq.s32.totalorder %v175, %v172
    %v177 = vsel %vm176, 1, 0
    %v178 = vcvt.s32.f32 %v177
    %v179 = vld [vmem:[#allocation5] sm:$0xff]
    %v180 = vld [vmem:[#allocation5 + $0x8] sm:$0xff]
    %vm181 = vcmask 130048
    %v183 = vsel %vm181, %v178, 0
    %185 = vmatpush.msra.mxu0 0.0
    %186 = vmatpush.msra.mxu0 0.0
    %187 = vmatpush.msra.mxu0 0.0
    %188 = vmatpush.msra.mxu0 0.0
    %189 = vmatpush.msra.mxu0 0.0
    %190 = vmatpush.msra.mxu0 0.0
    %191 = vmatpush.msra.mxu0 0.0
    %192 = vmatpush.msra.mxu0 0.0
    %193 = vmatpush.msra.mxu0 0.0
    %194 = vmatpush.msra.mxu0 0.0
    %195 = vmatpush.msra.mxu0 0.0
    %196 = vmatpush.msra.mxu0 0.0
    %197 = vmatpush.msra.mxu0 0.0
    %198 = vmatpush.msra.mxu0 0.0
    %199 = vmatpush.msra.mxu0 %v180
    %200 = vmatpush.msra.mxu0 %v179
    %201 = vmatmul.f32.gmra.mxu0 %v183
    %v202 = vpop.f32.mrf.mxu0
    %v203 = vadd.f32 0.0, %v202
    %204 = vdwg.mxu0
    %v205 = vld [vmem:[%s4] sm:$0xff]
    %v206 = vld [vmem:[%s4 + $0x8] sm:$0xff]
    %v207 = vld [vmem:[%s4 + $0x10] sm:$0xff]
    %v208 = vld [vmem:[%s4 + $0x18] sm:$0xff]
    %v209 = vld [vmem:[%s6] sm:$0x1]
    %v211 = vperm.slane %v209, 0
    %vm213 = vcmask 261120
    %v215 = vsel %vm213, %v167, 0
    %217 = vmatpush.msra.mxu0 0.0
    %218 = vmatpush.msra.mxu0 0.0
    %219 = vmatpush.msra.mxu0 0.0
    %220 = vmatpush.msra.mxu0 0.0
    %221 = vmatpush.msra.mxu0 0.0
    %222 = vmatpush.msra.mxu0 0.0
    %223 = vmatpush.msra.mxu0 0.0
    %224 = vmatpush.msra.mxu0 0.0
    %225 = vmatpush.msra.mxu0 0.0
    %226 = vmatpush.msra.mxu0 0.0
    %227 = vmatpush.msra.mxu0 0.0
    %228 = vmatpush.msra.mxu0 0.0
    %229 = vmatpush.msra.mxu0 %v208
    %230 = vmatpush.msra.mxu0 %v207
    %231 = vmatpush.msra.mxu0 %v206
    %232 = vmatpush.msra.mxu0 %v205
    %233 = vmatmul.f32.gmra.mxu0 %v215
    %v234 = vpop.f32.mrf.mxu0
    %v235 = vadd.f32 %v211, %v234
    %236 = vdwg.mxu0
    %v237 = vld [vmem:[#allocation7] sm:$0xff]
    %v238 = vld [vmem:[#allocation7 + $0x8] sm:$0xff]
    %v239 = vld [vmem:[#allocation7 + $0x10] sm:$0xff]
    %v240 = vld [vmem:[#allocation7 + $0x18] sm:$0xff]
    %v242 = vrot.slane %v235, 1
    %v243 = vperm.slane %v235, 0
    %v244 = vperm.slane %v242, 0
    %v248 = vsel %vm213, %v168, 0
    %250 = vmatpush.msra.mxu0 0.0
    %251 = vmatpush.msra.mxu0 0.0
    %252 = vmatpush.msra.mxu0 0.0
    %253 = vmatpush.msra.mxu0 0.0
    %254 = vmatpush.msra.mxu0 0.0
    %255 = vmatpush.msra.mxu0 0.0
    %256 = vmatpush.msra.mxu0 0.0
    %257 = vmatpush.msra.mxu0 0.0
    %258 = vmatpush.msra.mxu0 0.0
    %259 = vmatpush.msra.mxu0 0.0
    %260 = vmatpush.msra.mxu0 0.0
    %261 = vmatpush.msra.mxu0 0.0
    %262 = vmatpush.msra.mxu0 %v240
    %263 = vmatpush.msra.mxu0 %v239
    %264 = vmatpush.msra.mxu0 %v238
    %265 = vmatpush.msra.mxu0 %v237
    %266 = vmatmul.f32.gmra.mxu0 %v248
    %v267 = vpop.f32.mrf.mxu0
    %v268 = vadd.f32 %v243, %v267
    %269 = vdwg.mxu0
    %v271 = vsel %vm213, %v169, 0
    %273 = vmatpush.msra.mxu0 0.0
    %274 = vmatpush.msra.mxu0 0.0
    %275 = vmatpush.msra.mxu0 0.0
    %276 = vmatpush.msra.mxu0 0.0
    %277 = vmatpush.msra.mxu0 0.0
    %278 = vmatpush.msra.mxu0 0.0
    %279 = vmatpush.msra.mxu0 0.0
    %280 = vmatpush.msra.mxu0 0.0
    %281 = vmatpush.msra.mxu0 0.0
    %282 = vmatpush.msra.mxu0 0.0
    %283 = vmatpush.msra.mxu0 0.0
    %284 = vmatpush.msra.mxu0 0.0
    %285 = vmatpush.msra.mxu0 %v240
    %286 = vmatpush.msra.mxu0 %v239
    %287 = vmatpush.msra.mxu0 %v238
    %288 = vmatpush.msra.mxu0 %v237
    %289 = vmatmul.f32.gmra.mxu0 %v271
    %v290 = vpop.f32.mrf.mxu0
    %v291 = vadd.f32 %v244, %v290
    %292 = vdwg.mxu0
    %v293 = vmax.f32 %v268, 0.0
    %v294 = vmax.f32 %v291, 0.0
    %v295 = vld [vmem:[#allocation8] sm:$0x1]
    %v297 = vperm.slane %v295, 0
    %v299 = vmul.f32 %v293, %v297
    %v300 = vmul.f32 %v294, %v297
    %v301 = vsel %vm213, %v299, 0.0
    %302 = vadd.xlane.f32.xlu0 %v301
    %v303 = vpop.xlane.xlu0 %302
    %v304 = vsel %vm213, %v300, 0.0
    %305 = vadd.xlane.f32.xlu0 %v304
    %v306 = vpop.xlane.xlu0 %305
    %v309 = vperm.slane %v303, %v172
    %v310 = vperm.slane %v306, %v172
    %vm311 = vcmask 1041409
    %v312 = vsel %vm311, %v310, %v309
    %vm314 = vcmask 58368
    %v315 = vsel %vm314, %v312, -inf
    %316 = vmax.xlane.f32.xlu0 %v315
    %v317 = vpop.xlane.xlu0 %316
    %v319 = vperm.slane %v317, 0
    %v320 = vperm.slane %v317, 1
    %v323 = vsub.f32 %v303, %v319
    %v324 = vsub.f32 %v306, %v320
    %v325 = vmul.f32 %v323, 1.442695
    %v326 = vpow.pop %v325
    %v327 = vmul.f32 %v324, 1.442695
    %v328 = vpow.pop %v327
    %331 = vset.pattern.permute.xlu0 0
    %332 = vperm.xlu0 %331, %v326
    %v333 = vpop.permute.xlu0 %332
    %334 = vset.pattern.permute.xlu0 0
    %335 = vperm.xlu0 %334, %v328
    %v336 = vpop.permute.xlu0 %335
    %v337 = vperm.slane %v333, %v172
    %v338 = vperm.slane %v336, %v172
    %v339 = vsel %vm311, %v338, %v337
    %v341 = vsel %vm314, %v339, 0.0
    %342 = vadd.xlane.f32.xlu0 %v341
    %v343 = vpop.xlane.xlu0 %342
    %v345 = vperm.slane %v343, 0
    %v346 = vperm.slane %v343, 1
    %v349 = vrcp.pop %v345
    %v350 = vmul.f32 %v345, %v349
    %v351 = vsub.f32 1.0, %v350
    %v352 = vmul.f32 %v349, %v351
    %v353 = vadd.f32 %v349, %v352
    %vm354 = vweird.f32 %v345
    %vm355 = vweird.f32 %v349
    %vm356 = vmor %vm354, %vm355
    %v357 = vsel %vm356, %v349, %v353
    %v358 = vand.u32 2147483647, %v345
    %vm359 = vcmp.eq.f32.partialorder %v358, 8.507059e+37
    %v360 = vand.u32 %v345, 2147483648
    %v361 = vor.u32 1.1754944e-38, %v360
    %v362 = vsel %vm359, %v361, %v357
    %v363 = vmul.f32 %v326, %v362
    %v364 = vrcp.pop %v346
    %v365 = vmul.f32 %v346, %v364
    %v366 = vsub.f32 1.0, %v365
    %v367 = vmul.f32 %v364, %v366
    %v368 = vadd.f32 %v364, %v367
    %vm369 = vweird.f32 %v346
    %vm370 = vweird.f32 %v364
    %vm371 = vmor %vm369, %vm370
    %v372 = vsel %vm371, %v364, %v368
    %v373 = vand.u32 2147483647, %v346
    %vm374 = vcmp.eq.f32.partialorder %v373, 8.507059e+37
    %v375 = vand.u32 %v346, 2147483648
    %v376 = vor.u32 1.1754944e-38, %v375
    %v377 = vsel %vm374, %v376, %v372
    %v378 = vmul.f32 %v328, %v377
    %381 = vset.pattern.permute.xlu0 0
    %382 = vperm.xlu0 %381, %v363
    %v383 = vpop.permute.xlu0 %382
    %384 = vset.pattern.permute.xlu0 0
    %385 = vperm.xlu0 %384, %v378
    %v386 = vpop.permute.xlu0 %385
    %v387 = vperm.slane %v383, %v172
    %v388 = vperm.slane %v386, %v172
    %v389 = vsel %vm311, %v388, %v387
    %391 = vst.msk [vmem:[#allocation19] sm:$0x3] %vm314, %v389
    %v394 = vmul.f32 %v383, %v168
    %v395 = vmul.f32 %v386, %v169
    %v396 = vsel %vm213, %v394, 0.0
    %v397 = vrot.slane %v396, 4
    %v398 = vadd.f32 %v396, %v397
    %v399 = vrot.slane %v398, 2
    %v400 = vadd.f32 %v398, %v399
    %v401 = vrot.slane %v400, 1
    %v402 = vadd.f32 %v400, %v401
    %v403 = vsel %vm213, %v395, 0.0
    %v404 = vrot.slane %v403, 4
    %v405 = vadd.f32 %v403, %v404
    %v406 = vrot.slane %v405, 2
    %v407 = vadd.f32 %v405, %v406
    %v408 = vrot.slane %v407, 1
    %v409 = vadd.f32 %v407, %v408
    %v412 = vsel %vm311, %v409, %v402
    %413 = vrot.lane.b32.xlu0 %v412, 32
    %v414 = vpop.permute.xlu0 %413
    %v416 = vsel %vm213, %v203, %v414
    %v417 = vld [vmem:[%s8] sm:$0xff]
    %v418 = vld [vmem:[%s8 + $0x8] sm:$0xff]
    %v419 = vld [vmem:[%s8 + $0x10] sm:$0xff]
    %v420 = vld [vmem:[%s8 + $0x18] sm:$0xff]
    %v421 = vld [vmem:[%s8 + $0x20] sm:$0xff]
    %v422 = vld [vmem:[%s8 + $0x28] sm:$0xff]
    %v423 = vld [vmem:[%s8 + $0x30] sm:$0xff]
    %v424 = vld [vmem:[%s8 + $0x38] sm:$0xff]
    %v425 = vld [vmem:[#allocation10] sm:$0x1]
    %v427 = vperm.slane %v425, 0
    %vm429 = vcmask 523264
    %v431 = vsel %vm429, %v416, 0
    %433 = vmatpush.msra.mxu0 0.0
    %434 = vmatpush.msra.mxu0 0.0
    %435 = vmatpush.msra.mxu0 0.0
    %436 = vmatpush.msra.mxu0 0.0
    %437 = vmatpush.msra.mxu0 0.0
    %438 = vmatpush.msra.mxu0 0.0
    %439 = vmatpush.msra.mxu0 0.0
    %440 = vmatpush.msra.mxu0 0.0
    %441 = vmatpush.msra.mxu0 %v424
    %442 = vmatpush.msra.mxu0 %v423
    %443 = vmatpush.msra.mxu0 %v422
    %444 = vmatpush.msra.mxu0 %v421
    %445 = vmatpush.msra.mxu0 %v420
    %446 = vmatpush.msra.mxu0 %v419
    %447 = vmatpush.msra.mxu0 %v418
    %448 = vmatpush.msra.mxu0 %v417
    %449 = vmatmul.f32.gmra.mxu0 %v431
    %v450 = vpop.f32.mrf.mxu0
    %v451 = vadd.f32 %v427, %v450
    %452 = vdwg.mxu0
    %v453 = vld [vmem:[#allocation11] sm:$0xff]
    %v454 = vld [vmem:[#allocation11 + $0x8] sm:$0xff]
    %v455 = vld [vmem:[#allocation11 + $0x10] sm:$0xff]
    %v456 = vld [vmem:[#allocation11 + $0x18] sm:$0xff]
    %v457 = vld [vmem:[#allocation13] sm:$0x1]
    %v459 = vperm.slane %v457, 0
    %461 = vmatpush.msra.mxu0 0.0
    %462 = vmatpush.msra.mxu0 0.0
    %463 = vmatpush.msra.mxu0 0.0
    %464 = vmatpush.msra.mxu0 0.0
    %465 = vmatpush.msra.mxu0 0.0
    %466 = vmatpush.msra.mxu0 0.0
    %467 = vmatpush.msra.mxu0 0.0
    %468 = vmatpush.msra.mxu0 0.0
    %469 = vmatpush.msra.mxu0 0.0
    %470 = vmatpush.msra.mxu0 0.0
    %471 = vmatpush.msra.mxu0 0.0
    %472 = vmatpush.msra.mxu0 0.0
    %473 = vmatpush.msra.mxu0 %v456
    %474 = vmatpush.msra.mxu0 %v455
    %475 = vmatpush.msra.mxu0 %v454
    %476 = vmatpush.msra.mxu0 %v453
    %477 = vmatmul.f32.gmra.mxu0 %v215
    %v478 = vpop.f32.mrf.mxu0
    %v479 = vadd.f32 %v459, %v478
    %480 = vdwg.mxu0
    %v481 = vadd.f32 %v451, %v479
    %v482 = vxor.u32 %v481, 2147483648
    %v483 = vmul.f32 %v482, 1.442695
    %v484 = vpow.pop %v483
    %v485 = vadd.f32 %v484, 1.0
    %v486 = vrcp.pop %v485
    %v487 = vmul.f32 %v485, %v486
    %v488 = vsub.f32 1.0, %v487
    %v489 = vmul.f32 %v486, %v488
    %v490 = vadd.f32 %v486, %v489
    %vm491 = vweird.f32 %v485
    %vm492 = vweird.f32 %v486
    %vm493 = vmor %vm491, %vm492
    %v494 = vsel %vm493, %v486, %v490
    %v495 = vand.u32 2147483647, %v485
    %vm496 = vcmp.eq.f32.partialorder %v495, 8.507059e+37
    %v497 = vand.u32 %v485, 2147483648
    %v498 = vor.u32 1.1754944e-38, %v497
    %v499 = vsel %vm496, %v498, %v494
    %v500 = vmul.f32 1.0, %v499
    %502 = vrot.lane.b32.xlu0 %v479, 64
    %v503 = vpop.permute.xlu0 %502
    %v505 = vmul.f32 %v500, %v503
    %507 = vrot.lane.b32.xlu0 %v505, 64
    %v508 = vpop.permute.xlu0 %507
    %v510 = vadd.f32 %v451, %v508
    %v511 = vtanh.pop %v510
    %v512 = vsub.f32 1.0, %v500
    %514 = vrot.lane.b32.xlu0 %v511, 96
    %v515 = vpop.permute.xlu0 %514
    %v517 = vmul.f32 %v512, %v515
    %518 = vrot.lane.b32.xlu0 %v167, 32
    %v519 = vpop.permute.xlu0 %518
    %v521 = vmul.f32 %v500, %v519
    %v522 = vadd.f32 %v517, %v521
    %524 = vrot.lane.b32.xlu0 %v522, 96
    %v525 = vpop.permute.xlu0 %524
    %vm527 = vcmask 254976
    %528 = vst.msk [vmem:[#allocation17] sm:$0x3] %vm527, %v525
    %v529 = vsel %vm213, %v525, %v414
    %v530 = vld [vmem:[%s12] sm:$0xff]
    %v531 = vld [vmem:[%s12 + $0x8] sm:$0xff]
    %v532 = vld [vmem:[%s12 + $0x10] sm:$0xff]
    %v533 = vld [vmem:[%s12 + $0x18] sm:$0xff]
    %v534 = vld [vmem:[%s12 + $0x20] sm:$0xff]
    %v535 = vld [vmem:[%s12 + $0x28] sm:$0xff]
    %v536 = vld [vmem:[%s12 + $0x30] sm:$0xff]
    %v537 = vld [vmem:[%s12 + $0x38] sm:$0xff]
    %v538 = vld [vmem:[#allocation14] sm:$0x1]
    %v540 = vperm.slane %v538, 0
    %v543 = vsel %vm429, %v529, 0
    %545 = vmatpush.msra.mxu0 0.0
    %546 = vmatpush.msra.mxu0 0.0
    %547 = vmatpush.msra.mxu0 0.0
    %548 = vmatpush.msra.mxu0 0.0
    %549 = vmatpush.msra.mxu0 0.0
    %550 = vmatpush.msra.mxu0 0.0
    %551 = vmatpush.msra.mxu0 0.0
    %552 = vmatpush.msra.mxu0 0.0
    %553 = vmatpush.msra.mxu0 %v537
    %554 = vmatpush.msra.mxu0 %v536
    %555 = vmatpush.msra.mxu0 %v535
    %556 = vmatpush.msra.mxu0 %v534
    %557 = vmatpush.msra.mxu0 %v533
    %558 = vmatpush.msra.mxu0 %v532
    %559 = vmatpush.msra.mxu0 %v531
    %560 = vmatpush.msra.mxu0 %v530
    %561 = vmatmul.f32.gmra.mxu0 %v543
    %v562 = vpop.f32.mrf.mxu0
    %v563 = vadd.f32 %v540, %v562
    %564 = vdwg.mxu0
    %vm565 = vcmask 123904
    %566 = vst.msk [vmem:[#allocation16] sm:$0x3] %vm565, %v563
    // Predicated region
    $region90: #{decoder_forward.1} parent=1 // pred_check
      _
    $region91: #{decoder_forward.1} parent=1 // pred_check_branch
      %568 = sbr.rel (0) target = $region93
    $region92: #{decoder_forward.1} parent=1 // pred_region
      %570 = vsyncadd [#allocation4], 0
      %s572 = sshll.u32 [#allocation16], 4
      %s573 = int_to_ptr.vmem [resolvable:$true] %s572
      %s574 = sshll.u32 %s14, 4
      %s575 = int_to_ptr.hbm [resolvable:$true] %s574
      %577 = dma.vmem_to_hbm [thread:$0]  %s573, 32, %s575, [#allocation4]
    $region93: #{decoder_forward.1} parent=1 // pred_fallthru
      _
    // Predicated region
    $region94: #{decoder_forward.1} parent=1 // pred_check
      _
    $region95: #{decoder_forward.1} parent=1 // pred_check_branch
      %579 = sbr.rel (0) target = $region97
    $region96: #{decoder_forward.1} parent=1 // pred_region
      %581 = vsyncadd [#allocation18], 0
      %s583 = sshll.u32 [#allocation17], 4
      %s584 = int_to_ptr.vmem [resolvable:$true] %s583
      %s585 = sshll.u32 %s15, 4
      %s586 = int_to_ptr.hbm [resolvable:$true] %s585
      %588 = dma.vmem_to_hbm [thread:$0]  %s584, 32, %s586, [#allocation18]
    $region97: #{decoder_forward.1} parent=1 // pred_fallthru
      _
    // Predicated region
    $region98: #{decoder_forward.1} parent=1 // pred_check
      _
    $region99: #{decoder_forward.1} parent=1 // pred_check_branch
      %590 = sbr.rel (0) target = $region101
    $region100: #{decoder_forward.1} parent=1 // pred_region
      %592 = vsyncadd [#allocation18], 0
      %s594 = sshll.u32 [#allocation19], 4
      %s595 = int_to_ptr.vmem [resolvable:$true] %s594
      %s596 = sshll.u32 %s16, 4
      %s597 = int_to_ptr.hbm [resolvable:$true] %s596
      %599 = dma.vmem_to_hbm [thread:$0]  %s595, 32, %s597, [#allocation18]
    $region101: #{decoder_forward.1} parent=1 // pred_fallthru
      _
    // Predicated region
    $region102: #{decoder_forward.1} parent=1 // pred_check
      _
    $region103: #{decoder_forward.1} parent=1 // pred_check_branch
      %601 = sbr.rel (0) target = $region105
    $region104: #{decoder_forward.1} parent=1 // pred_region
      %603 = dma.done [#allocation4], 32
    $region105: #{decoder_forward.1} parent=1 // pred_fallthru
      _
    // Predicated region
    $region106: #{decoder_forward.1} parent=1 // pred_check
      _
    $region107: #{decoder_forward.1} parent=1 // pred_check_branch
      %605 = sbr.rel (0) target = $region109
    $region108: #{decoder_forward.1} parent=1 // pred_region
      %607 = dma.done [#allocation18], 32
    $region109: #{decoder_forward.1} parent=1 // pred_fallthru
      _
    // Predicated region
    $region110: #{decoder_forward.1} parent=1 // pred_check
      _
    $region111: #{decoder_forward.1} parent=1 // pred_check_branch
      %609 = sbr.rel (0) target = $region113
    $region112: #{decoder_forward.1} parent=1 // pred_region
      %611 = dma.done [#allocation18], 32
    $region113: #{decoder_forward.1} parent=1 // pred_fallthru
      _
    %612 = vsyncpa [#allocation3], 1
    %613 = vsyncpa [#allocation6], 1
    %614 = vsyncpa [#allocation9], 1
    %615 = vsyncpa [#allocation12], 1
    %616 = vsyncpa [#allocation15], 1
    %617 = vsyncpa [#allocation4], 1
    %618 = vsyncpa [#allocation18], 1

</llo_original>
